<compile_context>
chip_gen: v7x
topology: tpu7x:2x2x1
jax: 0.10.0
libtpu: 0.0.40
codegen_flags: <defaults>
</compile_context>

<pallas_src>
import functools
import math

import jax
import jax.numpy as jnp
from jax.experimental import pallas as pl
from jax.experimental.pallas import tpu as pltpu


def _round_up(x, m):
    return ((x + m - 1) // m) * m


# ----------------------------------------------------------------------------
# In-kernel helpers (kept in f32)
# ----------------------------------------------------------------------------
def _layernorm(x, w, b, eps=1e-6):
    mu = jnp.mean(x, axis=-1, keepdims=True)
    xc = x - mu
    var = jnp.mean(xc * xc, axis=-1, keepdims=True)
    return xc * jax.lax.rsqrt(var + eps) * w + b


def _gelu(x):
    # TODO(synk): PyTorch nn.GELU default is the exact erf form; the tanh
    # approximation is used to guarantee Mosaic lowering (max dev ~1e-3).
    return jax.nn.gelu(x, approximate=True)


# ----------------------------------------------------------------------------
# Pallas kernels
# ----------------------------------------------------------------------------
def patch_embed_kernel(p_ref, w_ref, b_ref, o_ref):
    # p: (tile, C*p*p) bf16, w: (C*p*p, D) bf16, b: (1, D) f32 -> o: (tile, D) f32
    o_ref[...] = (
        jnp.dot(p_ref[...], w_ref[...], preferred_element_type=jnp.float32)
        + b_ref[...]
    )


def encoder_stack_kernel(
    x_ref, ln1w_ref, ln1b_ref, wqkv_ref, bqkv_ref, wproj_ref, bproj_ref, ls1_ref,
    ln2w_ref, ln2b_ref, w1_ref, b1_ref, w2_ref, b2_ref, ls2_ref, out_ref,
    *, n_heads, seq_len,
):
    layer = pl.program_id(1)

    # The residual stream lives in the output block, whose block index is
    # constant along the depth axis -> it stays resident in VMEM across layers.
    @pl.when(layer == 0)
    def _():
        out_ref[...] = x_ref[...]

    x = out_ref[0]                                  # (S_pad, D) f32
    s_pad, d = x.shape
    dh = d // n_heads
    scale = 1.0 / math.sqrt(dh)

    # ---------------- self-attention branch ----------------
    h = _layernorm(x, ln1w_ref[0], ln1b_ref[0])
    qkv = (
        jnp.dot(h.astype(jnp.bfloat16), wqkv_ref[0],
                preferred_element_type=jnp.float32)
        + bqkv_ref[0]
    )                                               # (S_pad, 3D) f32

    def split_heads(t):                             # (S_pad, D) -> (H, S_pad, dh)
        return jnp.transpose(t.reshape(s_pad, n_heads, dh), (1, 0, 2))

    q = split_heads(qkv[:, :d]).astype(jnp.bfloat16)
    k = split_heads(qkv[:, d:2 * d]).astype(jnp.bfloat16)
    v = split_heads(qkv[:, 2 * d:]).astype(jnp.bfloat16)

    scores = jnp.einsum(
        "hqd,hkd->hqk", q, k, preferred_element_type=jnp.float32
    ) * scale                                       # (H, S_pad, S_pad) f32
    if seq_len != s_pad:                            # mask padded key positions
        key_ids = jax.lax.broadcasted_iota(jnp.int32, (1, 1, s_pad), 2)
        scores = jnp.where(key_ids < seq_len, scores, -1e30)

    scores = scores - jnp.max(scores, axis=-1, keepdims=True)
    p = jnp.exp(scores)
    p = p * pl.reciprocal(jnp.sum(p, axis=-1, keepdims=True), approx=True)

    ctx = jnp.einsum(
        "hqk,hkd->hqd", p.astype(jnp.bfloat16), v,
        preferred_element_type=jnp.float32,
    )                                               # (H, S_pad, dh) f32
    attn_out = jnp.transpose(ctx, (1, 0, 2)).reshape(s_pad, d)

    y = (
        jnp.dot(attn_out.astype(jnp.bfloat16), wproj_ref[0],
                preferred_element_type=jnp.float32)
        + bproj_ref[0]
    )
    x1 = x + ls1_ref[0] * y                         # residual + LayerScale

    # ---------------- MLP branch ----------------
    h2 = _layernorm(x1, ln2w_ref[0], ln2b_ref[0])
    m = _gelu(
        jnp.dot(h2.astype(jnp.bfloat16), w1_ref[0],
                preferred_element_type=jnp.float32)
        + b1_ref[0]
    )
    m = (
        jnp.dot(m.astype(jnp.bfloat16), w2_ref[0],
                preferred_element_type=jnp.float32)
        + b2_ref[0]
    )
    out_ref[0] = x1 + ls2_ref[0] * m


def head_kernel(
    he_ref, ihc_ref, henw_ref, henb_ref, ihcnw_ref, ihcnb_ref,
    w1_ref, b1_ref, w2_ref, b2_ref, o_ref,
):
    # Final per-branch LayerNorm (applied on the CLS token; LN commutes with the
    # CLS slice since it is per-token) + fused 2-layer classifier.
    he = _layernorm(he_ref[...], henw_ref[...], henb_ref[...])
    ihc = _layernorm(ihc_ref[...], ihcnw_ref[...], ihcnb_ref[...])
    feat = jnp.concatenate([he, ihc], axis=-1).astype(jnp.bfloat16)
    h = _gelu(
        jnp.dot(feat, w1_ref[...], preferred_element_type=jnp.float32)
        + b1_ref[...]
    )
    o_ref[...] = (
        jnp.dot(h.astype(jnp.bfloat16), w2_ref[...],
                preferred_element_type=jnp.float32)
        + b2_ref[...]
    )


# ----------------------------------------------------------------------------
# Wrappers around pallas_call
# ----------------------------------------------------------------------------
def run_patch_embed(patches, w, b):
    rows, kdim = patches.shape
    d = w.shape[1]
    tile = 256
    if rows <= tile:
        rows_pad = _round_up(rows, 8)
        tile = rows_pad
    else:
        rows_pad = _round_up(rows, tile)
    if rows_pad != rows:
        patches = jnp.pad(patches, ((0, rows_pad - rows), (0, 0)))
    out = pl.pallas_call(
        patch_embed_kernel,
        out_shape=jax.ShapeDtypeStruct((rows_pad, d), jnp.float32),
        grid=(rows_pad // tile,),
        in_specs=[
            pl.BlockSpec((tile, kdim), lambda i: (i, 0)),
            pl.BlockSpec((kdim, d), lambda i: (0, 0)),
            pl.BlockSpec((1, d), lambda i: (0, 0)),
        ],
        out_specs=pl.BlockSpec((tile, d), lambda i: (i, 0)),
        compiler_params=pltpu.CompilerParams(
            dimension_semantics=("parallel",),
            vmem_limit_bytes=64 * 1024 * 1024,
        ),
    )(patches.astype(jnp.bfloat16), w, b)
    return out[:rows]


def run_encoder_stack(x, layers, n_heads, seq_len):
    b, s_pad, d = x.shape
    names = ("ln1w", "ln1b", "wqkv", "bqkv", "wproj", "bproj", "ls1",
             "ln2w", "ln2b", "w1", "b1", "w2", "b2", "ls2")
    ws = [layers[k] for k in names]
    depth = ws[0].shape[0]

    def weight_spec(arr):
        nz = arr.ndim - 1
        return pl.BlockSpec(
            (1,) + arr.shape[1:],
            lambda bi, li, _nz=nz: (li,) + (0,) * _nz,
        )

    in_specs = [pl.BlockSpec((1, s_pad, d), lambda bi, li: (bi, 0, 0))]
    in_specs += [weight_spec(w) for w in ws]

    return pl.pallas_call(
        functools.partial(encoder_stack_kernel, n_heads=n_heads, seq_len=seq_len),
        out_shape=jax.ShapeDtypeStruct((b, s_pad, d), jnp.float32),
        grid=(b, depth),
        in_specs=in_specs,
        out_specs=pl.BlockSpec((1, s_pad, d), lambda bi, li: (bi, 0, 0)),
        compiler_params=pltpu.CompilerParams(
            dimension_semantics=("parallel", "arbitrary"),
            vmem_limit_bytes=64 * 1024 * 1024,
        ),
    )(x, *ws)


def sincos_pos_embed(pos, dim):
    # TODO(synk): PosEmbedder source was not provided with the module; using a
    # fixed 2D sin/cos embedding of the supplied (B, N, 2) positions (dropout=0).
    pos = pos.astype(jnp.float32)
    half = dim // 2
    quarter = half // 2
    omega = 1.0 / (10000.0 ** (jnp.arange(quarter, dtype=jnp.float32) / quarter))

    def emb1d(coord):                          # (B, N) -> (B, N, half)
        ang = coord[..., None] * omega
        return jnp.concatenate([jnp.sin(ang), jnp.cos(ang)], axis=-1)

    return jnp.concatenate([emb1d(pos[..., 0]), emb1d(pos[..., 1])], axis=-1)


def vit_forward(x_img, pos, params, patch, n_heads):
    b, c, h, w = x_img.shape
    hp, wp = h // patch, w // patch
    n = hp * wp
    d = params["patch_w"].shape[1]

    # Patchify (Conv2d with stride==kernel) -> (B*N, C*p*p)
    patches = (
        x_img.reshape(b, c, hp, patch, wp, patch)
        .transpose(0, 2, 4, 1, 3, 5)
        .reshape(b * n, c * patch * patch)
        .astype(jnp.float32)
    )
    emb = run_patch_embed(patches, params["patch_w"], params["patch_b"])
    tokens = emb.reshape(b, n, d)

    cls = jnp.broadcast_to(params["cls_token"].astype(jnp.float32), (b, 1, d))
    x = jnp.concatenate([cls, tokens], axis=1)               # (B, S=N+1, D)

    pe = sincos_pos_embed(pos, d)                            # (B, N, D)
    pe = jnp.concatenate([jnp.zeros((b, 1, d), jnp.float32), pe], axis=1)
    x = x + pe

    # Pad tokens to a multiple of 8 sublanes; padded keys are masked in-kernel.
    s = n + 1
    s_pad = _round_up(s, 8)
    if s_pad != s:
        x = jnp.pad(x, ((0, 0), (0, s_pad - s), (0, 0)))

    x = run_encoder_stack(x, params["layers"], n_heads, seq_len=s)
    return x[:, 0, :]                                        # CLS token (B, D)


def dual_branch_vit_forward(params, he_img, he_pos, ihc_img, ihc_pos, patch, n_heads):
    he_cls = vit_forward(he_img, he_pos, params["he"], patch, n_heads)
    ihc_cls = vit_forward(ihc_img, ihc_pos, params["ihc"], patch, n_heads)
    b = he_cls.shape[0]
    n_classes = params["cls_w2"].shape[1]
    logits = pl.pallas_call(
        head_kernel,
        out_shape=jax.ShapeDtypeStruct((b, n_classes), jnp.float32),
    )(
        he_cls, ihc_cls,
        params["he"]["norm_w"], params["he"]["norm_b"],
        params["ihc"]["norm_w"], params["ihc"]["norm_b"],
        params["cls_w1"], params["cls_b1"], params["cls_w2"], params["cls_b2"],
    )
    return logits


# ----------------------------------------------------------------------------
# Deterministic parameter initialization (shapes per the module __init__).
# Per-layer weights are stacked along a leading depth axis; matmul weights are
# stored in bf16 (halves weight DMA / VMEM), everything else stays f32.
# ----------------------------------------------------------------------------
def init_vit_params(key, patch, in_ch, d, depth, mlp_ratio, init_values):
    hidden = int(d * mlp_ratio)
    keys = jax.random.split(key, 6)
    std = 0.02

    def nrm(k, shape):
        return std * jax.random.normal(k, shape, jnp.float32)

    layers = dict(
        ln1w=jnp.ones((depth, 1, d), jnp.float32),
        ln1b=jnp.zeros((depth, 1, d), jnp.float32),
        wqkv=nrm(keys[2], (depth, d, 3 * d)).astype(jnp.bfloat16),
        bqkv=jnp.zeros((depth, 1, 3 * d), jnp.float32),
        wproj=nrm(keys[3], (depth, d, d)).astype(jnp.bfloat16),
        bproj=jnp.zeros((depth, 1, d), jnp.float32),
        ls1=jnp.full((depth, 1, d), init_values, jnp.float32),
        ln2w=jnp.ones((depth, 1, d), jnp.float32),
        ln2b=jnp.zeros((depth, 1, d), jnp.float32),
        w1=nrm(keys[4], (depth, d, hidden)).astype(jnp.bfloat16),
        b1=jnp.zeros((depth, 1, hidden), jnp.float32),
        w2=nrm(keys[5], (depth, hidden, d)).astype(jnp.bfloat16),
        b2=jnp.zeros((depth, 1, d), jnp.float32),
        ls2=jnp.full((depth, 1, d), init_values, jnp.float32),
    )
    return dict(
        patch_w=nrm(keys[0], (in_ch * patch * patch, d)).astype(jnp.bfloat16),
        patch_b=jnp.zeros((1, d), jnp.float32),
        cls_token=nrm(keys[1], (1, 1, d)),
        layers=layers,
        norm_w=jnp.ones((1, d), jnp.float32),
        norm_b=jnp.zeros((1, d), jnp.float32),
    )


def init_dual_branch_params(key, patch, in_ch, d, depth, mlp_ratio, init_values, n_classes):
    k_he, k_ihc, k1, k2 = jax.random.split(key, 4)
    std = 0.02
    return dict(
        he=init_vit_params(k_he, patch, in_ch, d, depth, mlp_ratio, init_values),
        ihc=init_vit_params(k_ihc, patch, in_ch, d, depth, mlp_ratio, init_values),
        cls_w1=(std * jax.random.normal(k1, (2 * d, d), jnp.float32)).astype(jnp.bfloat16),
        cls_b1=jnp.zeros((1, d), jnp.float32),
        cls_w2=(std * jax.random.normal(k2, (d, n_classes), jnp.float32)).astype(jnp.bfloat16),
        cls_b2=jnp.zeros((1, n_classes), jnp.float32),
    )


# ----------------------------------------------------------------------------
# Main
# ----------------------------------------------------------------------------
if __name__ == "__main__":
    # Small config consistent with DualBranchViT's forward (D multiple of 128,
    # hidden = 5*D multiple of 128; S=17 tokens padded to 24 inside the model).
    B, C, IMG, PATCH = 2, 3, 16, 4          # -> N = 16 patches, S = 17 tokens
    EMBED_DIM, DEPTH, N_HEADS = 128, 2, 4
    MLP_RATIO, INIT_VALUES, N_CLASSES = 5, 1e-5, 4

    key = jax.random.PRNGKey(0)
    k_params, k_he, k_ihc = jax.random.split(key, 3)

    params = init_dual_branch_params(
        k_params, PATCH, C, EMBED_DIM, DEPTH, MLP_RATIO, INIT_VALUES, N_CLASSES
    )

    he_img = jax.random.normal(k_he, (B, C, IMG, IMG), jnp.float32)
    ihc_img = jax.random.normal(k_ihc, (B, C, IMG, IMG), jnp.float32)

    # Patch positions (B, N, 2): row/col grid coordinates of each patch.
    hp = IMG // PATCH
    grid_r, grid_c = jnp.meshgrid(jnp.arange(hp), jnp.arange(hp), indexing="ij")
    pos = jnp.stack([grid_r.reshape(-1), grid_c.reshape(-1)], axis=-1).astype(jnp.float32)
    he_pos = jnp.broadcast_to(pos, (B, hp * hp, 2))
    ihc_pos = jnp.broadcast_to(pos, (B, hp * hp, 2))

    logits = dual_branch_vit_forward(
        params, he_img, he_pos, ihc_img, ihc_pos, PATCH, N_HEADS
    )
    logits = jax.block_until_ready(logits)
    assert logits.shape == (B, N_CLASSES)
    assert bool(jnp.all(jnp.isfinite(logits)))
    print("KERNEL_OK")
</pallas_src>

<mosaic_0001>
module attributes {stable_mosaic.version = 11 : i64} {
  func.func @patch_embed_kernel(%arg0: i32, %arg1: memref<32x48xbf16, #tpu.memory_space<vmem>>, %arg2: memref<48x128xbf16, #tpu.memory_space<vmem>>, %arg3: memref<1x128xf32, #tpu.memory_space<vmem>>, %arg4: memref<32x128xf32, #tpu.memory_space<vmem>>) attributes {dimension_semantics = [#tpu.dimension_semantics<parallel>], iteration_bounds = array<i64: 1>, scalar_prefetch = 0 : i64, scratch_operands = 0 : i64, tpu.core_type = #tpu.core_type<tc>, window_params = [{transform_indices = @transform_0, window_bounds = array<i64: 32, 48>}, {pipeline_mode = #tpu.pipeline_mode<synchronous>, transform_indices = @transform_1, window_bounds = array<i64: 48, 128>}, {pipeline_mode = #tpu.pipeline_mode<synchronous>, transform_indices = @transform_2, window_bounds = array<i64: 1, 128>}, {transform_indices = @transform_3, window_bounds = array<i64: 32, 128>}]} {
    %c0 = arith.constant 0 : index
    %c0_0 = arith.constant 0 : index
    %0 = vector.load %arg1[%c0, %c0_0] : memref<32x48xbf16, #tpu.memory_space<vmem>>, vector<32x48xbf16>
    %c0_1 = arith.constant 0 : index
    %c0_2 = arith.constant 0 : index
    %1 = vector.load %arg2[%c0_1, %c0_2] : memref<48x128xbf16, #tpu.memory_space<vmem>>, vector<48x128xbf16>
    %cst = arith.constant dense<0.000000e+00> : vector<32x128xf32>
    %2 = tpu.matmul %0, %1, %cst {dimension_numbers = #tpu.dot_dimension_numbers<[1], [0], [0], [1], [0, 0, 1, 1], [], []>} : vector<32x48xbf16>, vector<48x128xbf16>, vector<32x128xf32> -> vector<32x128xf32>
    %c0_3 = arith.constant 0 : index
    %c0_4 = arith.constant 0 : index
    %3 = vector.load %arg3[%c0_3, %c0_4] : memref<1x128xf32, #tpu.memory_space<vmem>>, vector<1x128xf32>
    %4 = vector.broadcast %3 : vector<1x128xf32> to vector<32x128xf32>
    %5 = arith.addf %2, %4 : vector<32x128xf32>
    %c0_5 = arith.constant 0 : index
    %c0_6 = arith.constant 0 : index
    %6 = vector.load %arg4[%c0_5, %c0_6] : memref<32x128xf32, #tpu.memory_space<vmem>>, vector<32x128xf32>
    tpu.vector_store %arg4[%c0_5, %c0_6], %5 {strides = array<i32>} : memref<32x128xf32, #tpu.memory_space<vmem>>, vector<32x128xf32>,
    return
  }
  func.func @transform_0(%arg0: i32) -> (i32, i32) {
    %c0_i32 = arith.constant 0 : i32
    %c0_i32_0 = arith.constant 0 : i32
    return %arg0, %c0_i32 : i32, i32
  }
  func.func @transform_1(%arg0: i32) -> (i32, i32) {
    %c0_i32 = arith.constant 0 : i32
    %c0_i32_0 = arith.constant 0 : i32
    %c0_i32_1 = arith.constant 0 : i32
    return %c0_i32, %c0_i32_0 : i32, i32
  }
  func.func @transform_2(%arg0: i32) -> (i32, i32) {
    %c0_i32 = arith.constant 0 : i32
    %c0_i32_0 = arith.constant 0 : i32
    %c0_i32_1 = arith.constant 0 : i32
    return %c0_i32, %c0_i32_0 : i32, i32
  }
  func.func @transform_3(%arg0: i32) -> (i32, i32) {
    %c0_i32 = arith.constant 0 : i32
    %c0_i32_0 = arith.constant 0 : i32
    return %arg0, %c0_i32 : i32, i32
  }
}

</mosaic_0001>

<llo_original>
// kernel: tpu_custom_call.1
$region0: #{tpu_custom_call.1}
  #allocation0 [shape = 'u32[]', space=smem, size = 0x4, offset = 0x4, fixed_abs, tag = 'smem constant byte address 0x4 - core index']
  #allocation1 [shape = 'u32[144,128]{1,0:T(1,128)}', space=vmem, size = 0x12000, scoped, tag = 'internal scratch']
  %s0 = inlined_call_operand.hbm [shape: bf16[32,48], index: 0, kind: input, shape index: {}]
  %s1 = inlined_call_operand.hbm [shape: bf16[48,128], index: 1, kind: input, shape index: {}]
  %s2 = inlined_call_operand.hbm [shape: f32[1,128], index: 2, kind: input, shape index: {}]
  %s3 = inlined_call_operand.hbm [shape: f32[32,128], index: 3, kind: output, shape index: {}]
  %s4 = sld [smem:[#allocation0]]
  $region34: #{tpu_custom_call.1} parent=0
    _
  %s6 = ssub.s32 1, %s4
  %s7 = scalar_select 0, %s6, %s4
  $region1: #{tpu_custom_call.1} parent=0
    #allocation2 [shape = 'u8[8192]{0}', space=vmem, size = 0x2000, scoped, tag = 'input window, operand 0, single buffered']
    #allocation3 [shape = 's32[1]{0}', space=sflag, size = 0x4, scoped, tag = 'scoped memory for tpu_custom_call.1']
    #allocation4 [shape = 's32[1]{0}', space=sflag, size = 0x4, scoped, tag = 'scoped memory for tpu_custom_call.1']
    #allocation5 [shape = 'u8[12288]{0}', space=vmem, size = 0x3000, scoped, tag = 'input window, operand 1, single buffered']
    #allocation6 [shape = 's32[1]{0}', space=sflag, size = 0x4, scoped, tag = 'scoped memory for tpu_custom_call.1']
    #allocation7 [shape = 'u8[512]{0}', space=vmem, size = 0x400, scoped, tag = 'input window, operand 2, single buffered']
    #allocation8 [shape = 'u8[16384]{0}', space=vmem, size = 0x4000, scoped, tag = 'output window, operand 0, single buffered']
    %8 = vsyncpa [#allocation3], 0
    %9 = vsyncpa [#allocation6], 0
    %10 = vsyncpa [#allocation4], 0
    // Predicated region
    $region2: #{tpu_custom_call.1} parent=1 // pred_check
      _
    $region3: #{tpu_custom_call.1} parent=1 // pred_check_branch
      %12 = sbr.rel (0) target = $region5
    $region4: #{tpu_custom_call.1} parent=1 // pred_region
      %s14 = ssub.s32 256, 256
      %15 = vsyncadd [#allocation3], %s14
      %s16 = sshll.u32 [#allocation2], 4
      %s17 = int_to_ptr.vmem [resolvable:$true] %s16
      %22 = dma.hbm_to_vmem [thread:$0]  %s0, 256, %s17, [#allocation3], 64, 64, 4
    $region5: #{tpu_custom_call.1} parent=1 // pred_fallthru
      _
    // Predicated region
    $region6: #{tpu_custom_call.1} parent=1 // pred_check
      _
    $region7: #{tpu_custom_call.1} parent=1 // pred_check_branch
      %24 = sbr.rel (0) target = $region9
    $region8: #{tpu_custom_call.1} parent=1 // pred_region
      %s26 = ssub.s32 384, 384
      %27 = vsyncadd [#allocation6], %s26
      %s28 = sshll.u32 [#allocation5], 4
      %s29 = int_to_ptr.vmem [resolvable:$true] %s28
      %34 = dma.hbm_to_vmem [thread:$0]  %s1, 384, %s29, [#allocation6], 64, 64, 4
    $region9: #{tpu_custom_call.1} parent=1 // pred_fallthru
      _
    // Predicated region
    $region10: #{tpu_custom_call.1} parent=1 // pred_check
      _
    $region11: #{tpu_custom_call.1} parent=1 // pred_check_branch
      %36 = sbr.rel (0) target = $region13
    $region12: #{tpu_custom_call.1} parent=1 // pred_region
      %s38 = ssub.s32 16, 16
      %39 = vsyncadd [#allocation6], %s38
      %s41 = sshll.u32 [#allocation7], 4
      %s42 = int_to_ptr.vmem [resolvable:$true] %s41
      %44 = dma.hbm_to_vmem [thread:$0]  %s2, 16, %s42, [#allocation6]
    $region13: #{tpu_custom_call.1} parent=1 // pred_fallthru
      _
    // Predicated region
    $region14: #{tpu_custom_call.1} parent=1 // pred_check
      _
    $region15: #{tpu_custom_call.1} parent=1 // pred_check_branch
      %46 = sbr.rel (0) target = $region17
    $region16: #{tpu_custom_call.1} parent=1 // pred_region
      %47 = dma.done [#allocation3], 256
    $region17: #{tpu_custom_call.1} parent=1 // pred_fallthru
      _
    // Predicated region
    $region18: #{tpu_custom_call.1} parent=1 // pred_check
      _
    $region19: #{tpu_custom_call.1} parent=1 // pred_check_branch
      %49 = sbr.rel (0) target = $region21
    $region20: #{tpu_custom_call.1} parent=1 // pred_region
      %50 = dma.done [#allocation6], 384
    $region21: #{tpu_custom_call.1} parent=1 // pred_fallthru
      _
    // Predicated region
    $region22: #{tpu_custom_call.1} parent=1 // pred_check
      _
    $region23: #{tpu_custom_call.1} parent=1 // pred_check_branch
      %52 = sbr.rel (0) target = $region25
    $region24: #{tpu_custom_call.1} parent=1 // pred_region
      %53 = dma.done [#allocation6], 16
    $region25: #{tpu_custom_call.1} parent=1 // pred_fallthru
      _
    %v55 = vld [vmem:[#allocation2] sm:$0xf]
    %v56 = vld [vmem:[#allocation2 + $0x4] sm:$0xf]
    %v57 = vld [vmem:[#allocation2 + $0x8] sm:$0xf]
    %v58 = vld [vmem:[#allocation2 + $0xc] sm:$0xf]
    %v59 = vld [vmem:[#allocation5] sm:$0xf]
    %v60 = vld [vmem:[#allocation5 + $0x4] sm:$0xf]
    %v61 = vld [vmem:[#allocation5 + $0x8] sm:$0xf]
    %v62 = vld [vmem:[#allocation5 + $0xc] sm:$0xf]
    %v63 = vld [vmem:[#allocation5 + $0x10] sm:$0xf]
    %v64 = vld [vmem:[#allocation5 + $0x14] sm:$0xf]
    %v65 = vld [vmem:[#allocation7] sm:$0x1]
    %v67 = vlaneseq
    %v68 = vshrl.u32 %v67, 7
    %v69 = vsub.s32 0, %v68
    %v70 = vrot.slane %v65, %v69
    %v76 = vunpack.c.l.b16 %v55
    %v77 = vunpack.c.l.b16 %v56
    %v78 = vunpack.c.l.b16 %v57
    %v79 = vunpack.c.l.b16 %v58
    %v80 = vpack.c.b16 %v77, %v76
    %v81 = vpack.c.b16 %v79, %v78
    %v88 = vunpack.c.l.b16 %v59
    %v89 = vunpack.c.l.b16 %v60
    %v90 = vunpack.c.l.b16 %v61
    %v91 = vunpack.c.l.b16 %v62
    %v92 = vunpack.c.l.b16 %v63
    %v93 = vunpack.c.l.b16 %v64
    %v94 = vpack.c.b16 %v89, %v88
    %v95 = vpack.c.b16 %v91, %v90
    %v96 = vpack.c.b16 %v93, %v92
    %vm100 = vcmask 392192
    %v102 = vsel %vm100, %v80, 0
    %v105 = vsel %vm100, %v81, 0
    %107 = vmatprep.subr.bf16.mxu0 0
    %108 = vmatpush1.bf16.msra.mxu0 %v94
    %109 = vmatprep.subr.bf16.mxu0 0
    %110 = vmatpush1.bf16.msra.mxu0 %v95
    %111 = vmatprep.subr.bf16.mxu0 0
    %112 = vmatpush1.bf16.msra.mxu0 %v96
    %113 = vmatprep.subr.bf16.mxu0 0
    %114 = vmatpush1.bf16.msra.mxu0 0
    %115 = vmatprep.subr.bf16.mxu0 0
    %116 = vmatpush1.bf16.msra.mxu0 0
    %117 = vmatprep.subr.bf16.mxu0 0
    %118 = vmatpush1.bf16.msra.mxu0 0
    %119 = vmatprep.subr.bf16.mxu0 0
    %120 = vmatpush1.bf16.msra.mxu0 0
    %121 = vmatprep.subr.bf16.mxu0 0
    %122 = vmatpush1.bf16.msra.mxu0 0
    %123 = vmatprep.subr.bf16.mxu0 0
    %124 = vmatpush1.bf16.msra.mxu0 0
    %125 = vmatprep.subr.bf16.mxu0 0
    %126 = vmatpush1.bf16.msra.mxu0 0
    %127 = vmatprep.subr.bf16.mxu0 0
    %128 = vmatpush1.bf16.msra.mxu0 0
    %129 = vmatprep.subr.bf16.mxu0 0
    %130 = vmatpush1.bf16.msra.mxu0 0
    %131 = vmatprep.subr.bf16.mxu0 0
    %132 = vmatpush1.bf16.msra.mxu0 0
    %133 = vmatprep.subr.bf16.mxu0 0
    %134 = vmatpush1.bf16.msra.mxu0 0
    %135 = vmatprep.subr.bf16.mxu0 0
    %136 = vmatpush1.bf16.msra.mxu0 0
    %137 = vmatprep.subr.bf16.mxu0 0
    %138 = vmatpush1.bf16.msra.mxu0 0
    %139 = vmatprep.mubr.bf16.mxu0 0
    %140 = vmatmul.mubr.bf16.gmra.mrb[0].mxu0 %v102
    %v141 = vpop.f32.mrb[0].mxu0
    %v142 = vadd.f32 %v70, %v141
    %v143 = vpop.f32.mrb[0].mxu0
    %v144 = vpop.f32.mrb[0].mxu0
    %v145 = vadd.f32 %v70, %v144
    %v146 = vpop.f32.mrb[0].mxu0
    %147 = vmatprep.mubr.bf16.mxu0 0
    %148 = vmatmul.mubr.bf16.gmra.mrb[0].mxu0 %v105
    %v149 = vpop.f32.mrb[0].mxu0
    %v150 = vadd.f32 %v70, %v149
    %v151 = vpop.f32.mrb[0].mxu0
    %v152 = vpop.f32.mrb[0].mxu0
    %v153 = vadd.f32 %v70, %v152
    %v154 = vpop.f32.mrb[0].mxu0
    %155 = vdwg.mxu0
    %156 = vst [vmem:[#allocation8] sm:$0xff] %v142
    %157 = vst [vmem:[#allocation8 + $0x8] sm:$0xff] %v145
    %158 = vst [vmem:[#allocation8 + $0x10] sm:$0xff] %v150
    %159 = vst [vmem:[#allocation8 + $0x18] sm:$0xff] %v153
    // Predicated region
    $region26: #{tpu_custom_call.1} parent=1 // pred_check
      _
    $region27: #{tpu_custom_call.1} parent=1 // pred_check_branch
      %161 = sbr.rel (0) target = $region29
    $region28: #{tpu_custom_call.1} parent=1 // pred_region
      %s163 = ssub.s32 512, 512
      %164 = vsyncadd [#allocation4], %s163
      %s165 = sshll.u32 [#allocation8], 4
      %s166 = int_to_ptr.vmem [resolvable:$true] %s165
      %171 = dma.vmem_to_hbm [thread:$0]  %s166, 512, %s3, [#allocation4], 128, 128, 8
    $region29: #{tpu_custom_call.1} parent=1 // pred_fallthru
      _
    // Predicated region
    $region30: #{tpu_custom_call.1} parent=1 // pred_check
      _
    $region31: #{tpu_custom_call.1} parent=1 // pred_check_branch
      %173 = sbr.rel (0) target = $region33
    $region32: #{tpu_custom_call.1} parent=1 // pred_region
      %174 = dma.done [#allocation4], 512
    $region33: #{tpu_custom_call.1} parent=1 // pred_fallthru
      _
    %175 = vsyncpa [#allocation3], 1
    %176 = vsyncpa [#allocation6], 1
    %177 = vsyncpa [#allocation4], 1

</llo_original>
